<compile_context>
chip_gen: v6e
topology: v6e:2x2x1
jax: 0.10.0
libtpu: 0.0.40
codegen_flags: <defaults>
</compile_context>

<pallas_src>
import functools

import jax
import jax.numpy as jnp
from jax.experimental import pallas as pl
from jax.experimental.pallas import tpu as pltpu


# ---------------------------------------------------------------------------
# Kernel
# ---------------------------------------------------------------------------
def attention_kernel(dec_hx_ref, enc_out_ref, enc_feat_ref, mask_ref,
                     ws_wt_ref, ws_b_ref, v_wc_ref, w1_t_ref, w2_t_ref,
                     lin_b_ref,
                     out_ref,
                     dec_feat_ref, m_ref, l_ref, acc_ref,
                     *, t_k, apply_tk_mask):
    """Grid = (b_blocks, t_k_tiles); t_k axis is an online-softmax reduction."""
    ti = pl.program_id(1)
    n_ti = pl.num_programs(1)
    tk_t, b_t, n_pd = enc_feat_ref.shape   # static tile dims

    @pl.when(ti == 0)
    def _init():
        # dec_feature = W_s(decoder_hx); weight already transposed -> plain dot.
        dec_feat_ref[...] = (
            jnp.dot(dec_hx_ref[...], ws_wt_ref[...],
                    preferred_element_type=jnp.float32)
            + ws_b_ref[...])
        m_ref[...] = jnp.full_like(m_ref, -jnp.inf)
        l_ref[...] = jnp.zeros_like(l_ref)
        acc_ref[...] = jnp.zeros_like(acc_ref)

    # --- scores for this t_k tile (streamed dtype -> f32 compute) ----------
    att = enc_feat_ref[...].astype(jnp.float32) + dec_feat_ref[...][None, :, :]
    e = jnp.tanh(att)                                        # (tk, b, n)

    # Score projection on the MXU: (tk*b, n) @ (n, 1) instead of a VPU
    # multiply + XLU lane-reduce over the whole slab.
    e2d = e.reshape(tk_t * b_t, n_pd)
    s = jnp.dot(e2d, v_wc_ref[...], preferred_element_type=jnp.float32)
    s = s.reshape(tk_t, b_t, 1)                              # (tk, b, 1)

    if apply_tk_mask:
        # In-kernel t_k-padding penalty (replaces the old score_bias stream).
        row = ti * tk_t + jax.lax.broadcasted_iota(jnp.int32, (tk_t, b_t, 1), 0)
        s = jnp.where(row < t_k, s, -1e30)

    # --- online softmax over t_k (denominator is UNmasked, matching
    #     `softmax(scores) * mask` semantics of the module) -----------------
    m_prev = m_ref[...]                                      # (b, 1)
    m_new = jnp.maximum(m_prev, jnp.max(s, axis=0))          # (b, 1)
    alpha = jnp.exp(m_prev - m_new)                          # (b, 1)
    p = jnp.exp(s - m_new[None, :, :])                       # (tk, b, 1)
    l_ref[...] = alpha * l_ref[...] + jnp.sum(p, axis=0)

    pm = p * mask_ref[...]                                   # masked numerator
    acc_ref[...] = (alpha * acc_ref[...]
                    + jnp.sum(pm * enc_out_ref[...].astype(jnp.float32), axis=0))
    m_ref[...] = m_new

    @pl.when(ti == n_ti - 1)
    def _finalize():
        # Exact reciprocal (runs once per batch block; restores tight accuracy).
        content = acc_ref[...] / l_ref[...]                  # (b, n)
        # linear(cat([content, dec_hx])) with pre-split, pre-transposed weights.
        final = jnp.tanh(
            jnp.dot(content, w1_t_ref[...], preferred_element_type=jnp.float32)
            + jnp.dot(dec_hx_ref[...], w2_t_ref[...],
                      preferred_element_type=jnp.float32)
            + lin_b_ref[...])
        out_ref[...] = final.astype(out_ref.dtype)


# ---------------------------------------------------------------------------
# Wrapper-side layout work (done once for weights, per-call for activations)
# ---------------------------------------------------------------------------
def _round_up(x, m):
    return ((x + m - 1) // m) * m


def _pad_to(x, shape):
    pads = [(0, t - s) for s, t in zip(x.shape, shape)]
    if all(p == (0, 0) for p in pads):
        return x
    return jnp.pad(x, pads)


def prepare_params(params, hidden_size):
    """Pre-transpose / pre-split / lane-pad the static weights (do this once)."""
    n = hidden_size
    n_pad = _round_up(max(n, 128), 128)

    def padmat(w):  # (n, n) -> (n_pad, n_pad), zero padded
        return jnp.pad(w, ((0, n_pad - w.shape[0]), (0, n_pad - w.shape[1])))

    def padrow(v):  # (n,) -> (1, n_pad)
        v = v.reshape(1, -1)
        return jnp.pad(v, ((0, 0), (0, n_pad - v.shape[-1])))

    lin_w = params["lin_w"]                       # (n, 2n)
    return {
        "n": n,
        "n_pad": n_pad,
        "ws_wt": padmat(params["W_s_w"].T),       # so kernel does x @ ws_wt
        "ws_b": padrow(params["W_s_b"]),
        # v weight as an (n_pad, 1) column so the score dot runs on the MXU.
        "v_wc": jnp.pad(params["v_w"].reshape(-1, 1), ((0, n_pad - n), (0, 0))),
        "w1_t": padmat(lin_w[:, :n].T),           # acts on content
        "w2_t": padmat(lin_w[:, n:].T),           # acts on decoder_hx
        "lin_b": padrow(params["lin_b"]),
        # v_b intentionally dropped: constant shift cancels under softmax.
    }


def _choose_tk_tile(t_k, b_tile, n_pad, enc_elem_bytes):
    """Pick the t_k tile from a generation-aware VMEM budget (v7x-safe)."""
    budget = 24 * 1024 * 1024                     # <= ~24 MiB working set (v7x)
    b_sub = _round_up(b_tile, 8)

    # Resident weights (counted double-buffered to be conservative), small
    # weight rows, dec_hx/out blocks, and the f32 scratch accumulators.
    fixed = (3 * n_pad * n_pad * 4 * 2            # ws_wt, w1_t, w2_t
             + 3 * 8 * n_pad * 4                  # ws_b, lin_b rows (sublane pad)
             + n_pad * 128 * 4                    # v column, lane padded
             + 2 * b_sub * n_pad * 4 * 2          # dec_hx in + out (2 buffers)
             + 2 * b_sub * n_pad * 4              # dec_feat + acc scratch
             + 2 * 8 * 128 * 4)                   # m, l scratch

    # Per t_k row, double-buffered: two encoder slabs + lane-padded mask row.
    per_row = (2 * b_sub * n_pad * enc_elem_bytes * 2
               + b_sub * 128 * 4 * 2)

    max_rows = max((budget - fixed) // per_row, 8)
    max_rows = (max_rows // 8) * 8

    t_k8 = _round_up(t_k, 8)
    if t_k8 <= max_rows:
        return t_k8, t_k8                          # whole t_k in one tile

    tile = min(512, max_rows)                      # >512 gives ~1% at best
    n_tiles = pl.cdiv(t_k, tile)
    tile = _round_up(pl.cdiv(t_k, n_tiles), 8)     # rebalance to cut padding
    return tile, tile * n_tiles


def attention_forward(decoder_hx, encoder_outputs, encoder_features,
                      mask_tensor, prepped, *, tk_tile=None):
    """decoder_hx (b,n) f32, encoder_* (t_k,b,n) f32/bf16, mask (t_k,b,1)."""
    t_k, b, n = encoder_outputs.shape
    n_pad = prepped["n_pad"]
    enc_dtype = encoder_outputs.dtype              # streamed as-is (bf16 ok)

    # Batch blocking: always sublane-aligned; split into >=2 blocks for large
    # batches so v7x's second TensorCore gets work (b_tile=16 is bf16-safe).
    if b >= 32 and b % 16 == 0:
        b_tile = 16
    else:
        b_tile = _round_up(b, 8)
    b_pad = _round_up(b, b_tile)

    if tk_tile is None:
        tk_tile, t_k_pad = _choose_tk_tile(t_k, b_tile, n_pad,
                                           enc_dtype.itemsize)
    else:
        tk_tile = max(8, (int(tk_tile) // 8) * 8)
        t_k_pad = _round_up(t_k, tk_tile)
    apply_tk_mask = (t_k_pad != t_k)

    # Lane-dense activations; zero padding provably contributes nothing.
    dec_hx = _pad_to(decoder_hx.astype(jnp.float32), (b_pad, n_pad))
    enc_out = _pad_to(encoder_outputs, (t_k_pad, b_pad, n_pad))
    enc_feat = _pad_to(encoder_features, (t_k_pad, b_pad, n_pad))
    mask = _pad_to(mask_tensor.reshape(t_k, b, 1).astype(jnp.float32),
                   (t_k_pad, b_pad, 1))

    grid = (b_pad // b_tile, t_k_pad // tk_tile)

    in_specs = [
        pl.BlockSpec((b_tile, n_pad), lambda bi, ti: (bi, 0)),               # dec_hx
        pl.BlockSpec((tk_tile, b_tile, n_pad), lambda bi, ti: (ti, bi, 0)),  # enc_out
        pl.BlockSpec((tk_tile, b_tile, n_pad), lambda bi, ti: (ti, bi, 0)),  # enc_feat
        pl.BlockSpec((tk_tile, b_tile, 1), lambda bi, ti: (ti, bi, 0)),      # mask
        pl.BlockSpec((n_pad, n_pad), lambda bi, ti: (0, 0)),                 # ws_wt
        pl.BlockSpec((1, n_pad), lambda bi, ti: (0, 0)),                     # ws_b
        pl.BlockSpec((n_pad, 1), lambda bi, ti: (0, 0)),                     # v column
        pl.BlockSpec((n_pad, n_pad), lambda bi, ti: (0, 0)),                 # w1_t
        pl.BlockSpec((n_pad, n_pad), lambda bi, ti: (0, 0)),                 # w2_t
        pl.BlockSpec((1, n_pad), lambda bi, ti: (0, 0)),                     # lin_b
    ]
    out_spec = pl.BlockSpec((b_tile, n_pad), lambda bi, ti: (bi, 0))

    scratch_shapes = [
        pltpu.VMEM((b_tile, n_pad), jnp.float32),   # dec_feature
        pltpu.VMEM((b_tile, 1), jnp.float32),       # running max m
        pltpu.VMEM((b_tile, 1), jnp.float32),       # running denom l
        pltpu.VMEM((b_tile, n_pad), jnp.float32),   # content accumulator
    ]

    kernel = functools.partial(attention_kernel, t_k=t_k,
                               apply_tk_mask=apply_tk_mask)

    # TODO(synk): for very large hidden sizes, hoist the finalize concat-linear
    # (and the W_s matmul) out of the kernel so the n_pad^2 weights stop
    # stealing encoder-tile VMEM budget.
    out_padded = pl.pallas_call(
        kernel,
        out_shape=jax.ShapeDtypeStruct((b_pad, n_pad), jnp.float32),
        grid_spec=pltpu.PrefetchScalarGridSpec(
            num_scalar_prefetch=0,
            grid=grid,
            in_specs=in_specs,
            out_specs=out_spec,
            scratch_shapes=scratch_shapes),
        compiler_params=pltpu.CompilerParams(
            dimension_semantics=("parallel", "arbitrary"),
            vmem_limit_bytes=32 * 1024 * 1024),
    )(dec_hx, enc_out, enc_feat, mask,
      prepped["ws_wt"], prepped["ws_b"], prepped["v_wc"],
      prepped["w1_t"], prepped["w2_t"], prepped["lin_b"])

    return out_padded[:b, :n]


# ---------------------------------------------------------------------------
# Pure-JAX reference (mirrors the PyTorch forward exactly)
# ---------------------------------------------------------------------------
def attention_reference(decoder_hx, encoder_outputs, encoder_features,
                        mask_tensor, params):
    dec_feature = decoder_hx @ params["W_s_w"].T + params["W_s_b"]
    att = encoder_features + dec_feature[None]
    e = jnp.tanh(att)
    scores = e @ params["v_w"].T + params["v_b"]          # (t_k, b, 1)
    align = jax.nn.softmax(scores, axis=0) * mask_tensor
    content = jnp.sum(align * encoder_outputs, axis=0)    # (b, n)
    concat = jnp.concatenate([content, decoder_hx], axis=1)
    return jnp.tanh(concat @ params["lin_w"].T + params["lin_b"])


def init_params(key, hidden_size):
    n = hidden_size
    ks = jax.random.split(key, 6)

    def u(k, shape, fan_in):
        bound = 1.0 / jnp.sqrt(fan_in)
        return jax.random.uniform(k, shape, jnp.float32, -bound, bound)

    return {
        "W_s_w": u(ks[0], (n, n), n),
        "W_s_b": u(ks[1], (n,), n),
        "v_w":   u(ks[2], (1, n), n),
        "v_b":   u(ks[3], (1,), n),
        "lin_w": u(ks[4], (n, 2 * n), 2 * n),
        "lin_b": u(ks[5], (n,), 2 * n),
    }


if __name__ == "__main__":
    hidden_size = 32
    t_k, b, n = 10, 2, hidden_size     # t_k=10 exercises the in-kernel pad mask

    key = jax.random.PRNGKey(0)
    k_p, k_hx, k_eo, k_ef, k_m = jax.random.split(key, 5)

    params = init_params(k_p, hidden_size)
    prepped = prepare_params(params, hidden_size)   # one-time weight layout work

    decoder_hx = jax.random.normal(k_hx, (b, n), jnp.float32)
    # Encoder tensors streamed in bf16 (halves HBM bytes); compute stays f32.
    encoder_outputs = jax.random.normal(k_eo, (t_k, b, n), jnp.float32).astype(jnp.bfloat16)
    encoder_features = jax.random.normal(k_ef, (t_k, b, n), jnp.float32).astype(jnp.bfloat16)
    # binary padding mask, shape (t_k, b, 1) like PyTorch
    mask_tensor = (jax.random.uniform(k_m, (t_k, b, 1)) > 0.2).astype(jnp.float32)

    # Run 1: auto tiling (single t_k tile, padded rows masked in-kernel).
    out = attention_forward(decoder_hx, encoder_outputs, encoder_features,
                            mask_tensor, prepped)
    # Run 2: force small t_k tiles to exercise the multi-tile online-softmax path.
    out_multi = attention_forward(decoder_hx, encoder_outputs, encoder_features,
                                  mask_tensor, prepped, tk_tile=8)
    out, out_multi = jax.block_until_ready((out, out_multi))

    ref = attention_reference(decoder_hx, encoder_outputs, encoder_features,
                              mask_tensor, params)
    assert out.shape == (b, n)
    assert out_multi.shape == (b, n)
    # Tolerance covers TPU default matmul precision (bf16 passes) on both sides;
    # the kernel itself accumulates in f32 and uses an exact reciprocal.
    assert jnp.allclose(out, ref, atol=5e-3, rtol=5e-3), "mismatch vs reference"
    assert jnp.allclose(out_multi, ref, atol=5e-3, rtol=5e-3), "multi-tile mismatch"

    print("KERNEL_OK")
</pallas_src>

<mosaic_0001>
module attributes {stable_mosaic.version = 11 : i64} {
  func.func @attention_kernel(%arg0: i32, %arg1: i32, %arg2: memref<8x128xf32, #tpu.memory_space<vmem>>, %arg3: memref<16x8x128xbf16, #tpu.memory_space<vmem>>, %arg4: memref<16x8x128xbf16, #tpu.memory_space<vmem>>, %arg5: memref<16x8x1xf32, #tpu.memory_space<vmem>>, %arg6: memref<128x128xf32, #tpu.memory_space<vmem>>, %arg7: memref<1x128xf32, #tpu.memory_space<vmem>>, %arg8: memref<128x1xf32, #tpu.memory_space<vmem>>, %arg9: memref<128x128xf32, #tpu.memory_space<vmem>>, %arg10: memref<128x128xf32, #tpu.memory_space<vmem>>, %arg11: memref<1x128xf32, #tpu.memory_space<vmem>>, %arg12: memref<8x128xf32, #tpu.memory_space<vmem>>, %arg13: memref<8x128xf32, #tpu.memory_space<vmem>>, %arg14: memref<8x1xf32, #tpu.memory_space<vmem>>, %arg15: memref<8x1xf32, #tpu.memory_space<vmem>>, %arg16: memref<8x128xf32, #tpu.memory_space<vmem>>) attributes {dimension_semantics = [#tpu.dimension_semantics<parallel>, #tpu.dimension_semantics<arbitrary>], iteration_bounds = array<i64: 1, 1>, scalar_prefetch = 0 : i64, scratch_operands = 4 : i64, tpu.core_type = #tpu.core_type<tc>, window_params = [{transform_indices = @transform_0, window_bounds = array<i64: 8, 128>}, {transform_indices = @transform_1, window_bounds = array<i64: 16, 8, 128>}, {transform_indices = @transform_2, window_bounds = array<i64: 16, 8, 128>}, {transform_indices = @transform_3, window_bounds = array<i64: 16, 8, 1>}, {pipeline_mode = #tpu.pipeline_mode<synchronous>, transform_indices = @transform_4, window_bounds = array<i64: 128, 128>}, {pipeline_mode = #tpu.pipeline_mode<synchronous>, transform_indices = @transform_5, window_bounds = array<i64: 1, 128>}, {pipeline_mode = #tpu.pipeline_mode<synchronous>, transform_indices = @transform_6, window_bounds = array<i64: 128, 1>}, {pipeline_mode = #tpu.pipeline_mode<synchronous>, transform_indices = @transform_7, window_bounds = array<i64: 128, 128>}, {pipeline_mode = #tpu.pipeline_mode<synchronous>, transform_indices = @transform_8, window_bounds = array<i64: 128, 128>}, {pipeline_mode = #tpu.pipeline_mode<synchronous>, transform_indices = @transform_9, window_bounds = array<i64: 1, 128>}, {transform_indices = @transform_10, window_bounds = array<i64: 8, 128>}]} {
    %c0_i32 = arith.constant 0 : i32
    %0 = arith.cmpi eq, %arg1, %c0_i32 : i32
    %1 = arith.extui %0 : i1 to i32
    %c0_i32_0 = arith.constant 0 : i32
    %2 = arith.cmpi ne, %1, %c0_i32_0 : i32
    scf.if %2 {
      %c0_31 = arith.constant 0 : index
      %c0_32 = arith.constant 0 : index
      %52 = vector.load %arg2[%c0_31, %c0_32] : memref<8x128xf32, #tpu.memory_space<vmem>>, vector<8x128xf32>
      %c0_33 = arith.constant 0 : index
      %c0_34 = arith.constant 0 : index
      %53 = vector.load %arg6[%c0_33, %c0_34] : memref<128x128xf32, #tpu.memory_space<vmem>>, vector<128x128xf32>
      %cst_35 = arith.constant dense<0.000000e+00> : vector<8x128xf32>
      %54 = tpu.matmul %52, %53, %cst_35 {dimension_numbers = #tpu.dot_dimension_numbers<[1], [0], [0], [1], [0, 0, 1, 1], [], []>} : vector<8x128xf32>, vector<128x128xf32>, vector<8x128xf32> -> vector<8x128xf32>
      %c0_36 = arith.constant 0 : index
      %c0_37 = arith.constant 0 : index
      %55 = vector.load %arg7[%c0_36, %c0_37] : memref<1x128xf32, #tpu.memory_space<vmem>>, vector<1x128xf32>
      %56 = vector.broadcast %55 : vector<1x128xf32> to vector<8x128xf32>
      %57 = arith.addf %54, %56 : vector<8x128xf32>
      %c0_38 = arith.constant 0 : index
      %c0_39 = arith.constant 0 : index
      %58 = vector.load %arg13[%c0_38, %c0_39] : memref<8x128xf32, #tpu.memory_space<vmem>>, vector<8x128xf32>
      tpu.vector_store %arg13[%c0_38, %c0_39], %57 {strides = array<i32>} : memref<8x128xf32, #tpu.memory_space<vmem>>, vector<8x128xf32>,
      %cst_40 = arith.constant 0xFF800000 : f32
      %59 = vector.broadcast %cst_40 : f32 to vector<8x1xf32>
      %c0_41 = arith.constant 0 : index
      %c0_42 = arith.constant 0 : index
      %60 = vector.load %arg14[%c0_41, %c0_42] : memref<8x1xf32, #tpu.memory_space<vmem>>, vector<8x1xf32>
      tpu.vector_store %arg14[%c0_41, %c0_42], %59 {strides = array<i32>} : memref<8x1xf32, #tpu.memory_space<vmem>>, vector<8x1xf32>,
      %cst_43 = arith.constant 0.000000e+00 : f32
      %61 = vector.broadcast %cst_43 : f32 to vector<8x1xf32>
      %c0_44 = arith.constant 0 : index
      %c0_45 = arith.constant 0 : index
      %62 = vector.load %arg15[%c0_44, %c0_45] : memref<8x1xf32, #tpu.memory_space<vmem>>, vector<8x1xf32>
      tpu.vector_store %arg15[%c0_44, %c0_45], %61 {strides = array<i32>} : memref<8x1xf32, #tpu.memory_space<vmem>>, vector<8x1xf32>,
      %cst_46 = arith.constant 0.000000e+00 : f32
      %63 = vector.broadcast %cst_46 : f32 to vector<8x128xf32>
      %c0_47 = arith.constant 0 : index
      %c0_48 = arith.constant 0 : index
      %64 = vector.load %arg16[%c0_47, %c0_48] : memref<8x128xf32, #tpu.memory_space<vmem>>, vector<8x128xf32>
      tpu.vector_store %arg16[%c0_47, %c0_48], %63 {strides = array<i32>} : memref<8x128xf32, #tpu.memory_space<vmem>>, vector<8x128xf32>,
    } else {
    }
    %c0 = arith.constant 0 : index
    %c0_1 = arith.constant 0 : index
    %c0_2 = arith.constant 0 : index
    %3 = vector.load %arg4[%c0, %c0_1, %c0_2] : memref<16x8x128xbf16, #tpu.memory_space<vmem>>, vector<16x8x128xbf16>
    %4 = arith.extf %3 : vector<16x8x128xbf16> to vector<16x8x128xf32>
    %c0_3 = arith.constant 0 : index
    %c0_4 = arith.constant 0 : index
    %5 = vector.load %arg13[%c0_3, %c0_4] : memref<8x128xf32, #tpu.memory_space<vmem>>, vector<8x128xf32>
    %6 = vector.shape_cast %5 : vector<8x128xf32> to vector<1x8x128xf32>
    %7 = vector.broadcast %6 : vector<1x8x128xf32> to vector<16x8x128xf32>
    %8 = arith.addf %4, %7 : vector<16x8x128xf32>
    %9 = math.tanh %8 : vector<16x8x128xf32>
    %10 = vector.shape_cast %9 : vector<16x8x128xf32> to vector<128x128xf32>
    %c0_5 = arith.constant 0 : index
    %c0_6 = arith.constant 0 : index
    %11 = vector.load %arg8[%c0_5, %c0_6] : memref<128x1xf32, #tpu.memory_space<vmem>>, vector<128x1xf32>
    %cst = arith.constant dense<0.000000e+00> : vector<128x1xf32>
    %12 = tpu.matmul %10, %11, %cst {dimension_numbers = #tpu.dot_dimension_numbers<[1], [0], [0], [1], [0, 0, 1, 1], [], []>} : vector<128x128xf32>, vector<128x1xf32>, vector<128x1xf32> -> vector<128x1xf32>
    %13 = vector.shape_cast %12 : vector<128x1xf32> to vector<16x8x1xf32>
    %c16_i32 = arith.constant 16 : i32
    %14 = arith.muli %arg1, %c16_i32 : i32
    %15 = tpu.iota {dimensions = array<i32: 0>} : vector<16x8x1xi32>
    %16 = vector.broadcast %14 : i32 to vector<16x8x1xi32>
    %17 = arith.addi %16, %15 : vector<16x8x1xi32>
    %c10_i32 = arith.constant 10 : i32
    %18 = vector.broadcast %c10_i32 : i32 to vector<16x8x1xi32>
    %19 = arith.cmpi slt, %17, %18 : vector<16x8x1xi32>
    %cst_7 = arith.constant -1.000000e+30 : f32
    %20 = vector.broadcast %cst_7 : f32 to vector<16x8x1xf32>
    %21 = arith.select %19, %13, %20 : vector<16x8x1xi1>, vector<16x8x1xf32>
    %c0_8 = arith.constant 0 : index
    %c0_9 = arith.constant 0 : index
    %22 = vector.load %arg14[%c0_8, %c0_9] : memref<8x1xf32, #tpu.memory_space<vmem>>, vector<8x1xf32>
    %cst_10 = arith.constant dense<0xFF800000> : vector<8x1xf32>
    %23 = vector.multi_reduction <maximumf>, %21, %cst_10 [0] : vector<16x8x1xf32> to vector<8x1xf32>
    %24 = arith.maximumf %22, %23 : vector<8x1xf32>
    %25 = arith.subf %22, %24 : vector<8x1xf32>
    %26 = math.exp %25 : vector<8x1xf32>
    %27 = vector.shape_cast %24 : vector<8x1xf32> to vector<1x8x1xf32>
    %28 = vector.broadcast %27 : vector<1x8x1xf32> to vector<16x8x1xf32>
    %29 = arith.subf %21, %28 : vector<16x8x1xf32>
    %30 = math.exp %29 : vector<16x8x1xf32>
    %c0_11 = arith.constant 0 : index
    %c0_12 = arith.constant 0 : index
    %31 = vector.load %arg15[%c0_11, %c0_12] : memref<8x1xf32, #tpu.memory_space<vmem>>, vector<8x1xf32>
    %32 = arith.mulf %26, %31 : vector<8x1xf32>
    %cst_13 = arith.constant dense<0.000000e+00> : vector<8x1xf32>
    %33 = vector.multi_reduction <add>, %30, %cst_13 [0] : vector<16x8x1xf32> to vector<8x1xf32>
    %34 = arith.addf %32, %33 : vector<8x1xf32>
    %c0_14 = arith.constant 0 : index
    %c0_15 = arith.constant 0 : index
    %35 = vector.load %arg15[%c0_14, %c0_15] : memref<8x1xf32, #tpu.memory_space<vmem>>, vector<8x1xf32>
    tpu.vector_store %arg15[%c0_14, %c0_15], %34 {strides = array<i32>} : memref<8x1xf32, #tpu.memory_space<vmem>>, vector<8x1xf32>,
    %c0_16 = arith.constant 0 : index
    %c0_17 = arith.constant 0 : index
    %c0_18 = arith.constant 0 : index
    %36 = vector.load %arg5[%c0_16, %c0_17, %c0_18] : memref<16x8x1xf32, #tpu.memory_space<vmem>>, vector<16x8x1xf32>
    %37 = arith.mulf %30, %36 : vector<16x8x1xf32>
    %c0_19 = arith.constant 0 : index
    %c0_20 = arith.constant 0 : index
    %38 = vector.load %arg16[%c0_19, %c0_20] : memref<8x128xf32, #tpu.memory_space<vmem>>, vector<8x128xf32>
    %39 = vector.broadcast %26 : vector<8x1xf32> to vector<8x128xf32>
    %40 = arith.mulf %39, %38 : vector<8x128xf32>
    %c0_21 = arith.constant 0 : index
    %c0_22 = arith.constant 0 : index
    %c0_23 = arith.constant 0 : index
    %41 = vector.load %arg3[%c0_21, %c0_22, %c0_23] : memref<16x8x128xbf16, #tpu.memory_space<vmem>>, vector<16x8x128xbf16>
    %42 = arith.extf %41 : vector<16x8x128xbf16> to vector<16x8x128xf32>
    %43 = vector.broadcast %37 : vector<16x8x1xf32> to vector<16x8x128xf32>
    %44 = arith.mulf %43, %42 : vector<16x8x128xf32>
    %cst_24 = arith.constant dense<0.000000e+00> : vector<8x128xf32>
    %45 = vector.multi_reduction <add>, %44, %cst_24 [0] : vector<16x8x128xf32> to vector<8x128xf32>
    %46 = arith.addf %40, %45 : vector<8x128xf32>
    %c0_25 = arith.constant 0 : index
    %c0_26 = arith.constant 0 : index
    %47 = vector.load %arg16[%c0_25, %c0_26] : memref<8x128xf32, #tpu.memory_space<vmem>>, vector<8x128xf32>
    tpu.vector_store %arg16[%c0_25, %c0_26], %46 {strides = array<i32>} : memref<8x128xf32, #tpu.memory_space<vmem>>, vector<8x128xf32>,
    %c0_27 = arith.constant 0 : index
    %c0_28 = arith.constant 0 : index
    %48 = vector.load %arg14[%c0_27, %c0_28] : memref<8x1xf32, #tpu.memory_space<vmem>>, vector<8x1xf32>
    tpu.vector_store %arg14[%c0_27, %c0_28], %24 {strides = array<i32>} : memref<8x1xf32, #tpu.memory_space<vmem>>, vector<8x1xf32>,
    %c0_i32_29 = arith.constant 0 : i32
    %49 = arith.cmpi eq, %arg1, %c0_i32_29 : i32
    %50 = arith.extui %49 : i1 to i32
    %c0_i32_30 = arith.constant 0 : i32
    %51 = arith.cmpi ne, %50, %c0_i32_30 : i32
    scf.if %51 {
      %c0_31 = arith.constant 0 : index
      %c0_32 = arith.constant 0 : index
      %52 = vector.load %arg16[%c0_31, %c0_32] : memref<8x128xf32, #tpu.memory_space<vmem>>, vector<8x128xf32>
      %c0_33 = arith.constant 0 : index
      %c0_34 = arith.constant 0 : index
      %53 = vector.load %arg15[%c0_33, %c0_34] : memref<8x1xf32, #tpu.memory_space<vmem>>, vector<8x1xf32>
      %54 = vector.broadcast %53 : vector<8x1xf32> to vector<8x128xf32>
      %55 = arith.divf %52, %54 : vector<8x128xf32>
      %c0_35 = arith.constant 0 : index
      %c0_36 = arith.constant 0 : index
      %56 = vector.load %arg9[%c0_35, %c0_36] : memref<128x128xf32, #tpu.memory_space<vmem>>, vector<128x128xf32>
      %cst_37 = arith.constant dense<0.000000e+00> : vector<8x128xf32>
      %57 = tpu.matmul %55, %56, %cst_37 {dimension_numbers = #tpu.dot_dimension_numbers<[1], [0], [0], [1], [0, 0, 1, 1], [], []>} : vector<8x128xf32>, vector<128x128xf32>, vector<8x128xf32> -> vector<8x128xf32>
      %c0_38 = arith.constant 0 : index
      %c0_39 = arith.constant 0 : index
      %58 = vector.load %arg2[%c0_38, %c0_39] : memref<8x128xf32, #tpu.memory_space<vmem>>, vector<8x128xf32>
      %c0_40 = arith.constant 0 : index
      %c0_41 = arith.constant 0 : index
      %59 = vector.load %arg10[%c0_40, %c0_41] : memref<128x128xf32, #tpu.memory_space<vmem>>, vector<128x128xf32>
      %cst_42 = arith.constant dense<0.000000e+00> : vector<8x128xf32>
      %60 = tpu.matmul %58, %59, %cst_42 {dimension_numbers = #tpu.dot_dimension_numbers<[1], [0], [0], [1], [0, 0, 1, 1], [], []>} : vector<8x128xf32>, vector<128x128xf32>, vector<8x128xf32> -> vector<8x128xf32>
      %61 = arith.addf %57, %60 : vector<8x128xf32>
      %c0_43 = arith.constant 0 : index
      %c0_44 = arith.constant 0 : index
      %62 = vector.load %arg11[%c0_43, %c0_44] : memref<1x128xf32, #tpu.memory_space<vmem>>, vector<1x128xf32>
      %63 = vector.broadcast %62 : vector<1x128xf32> to vector<8x128xf32>
      %64 = arith.addf %61, %63 : vector<8x128xf32>
      %65 = math.tanh %64 : vector<8x128xf32>
      %c0_45 = arith.constant 0 : index
      %c0_46 = arith.constant 0 : index
      %66 = vector.load %arg12[%c0_45, %c0_46] : memref<8x128xf32, #tpu.memory_space<vmem>>, vector<8x128xf32>
      tpu.vector_store %arg12[%c0_45, %c0_46], %65 {strides = array<i32>} : memref<8x128xf32, #tpu.memory_space<vmem>>, vector<8x128xf32>,
    } else {
    }
    return
  }
  func.func @transform_0(%arg0: i32, %arg1: i32) -> (i32, i32) {
    %c0_i32 = arith.constant 0 : i32
    %c0_i32_0 = arith.constant 0 : i32
    return %arg0, %c0_i32 : i32, i32
  }
  func.func @transform_1(%arg0: i32, %arg1: i32) -> (i32, i32, i32) {
    %c0_i32 = arith.constant 0 : i32
    %c0_i32_0 = arith.constant 0 : i32
    return %arg1, %arg0, %c0_i32 : i32, i32, i32
  }
  func.func @transform_2(%arg0: i32, %arg1: i32) -> (i32, i32, i32) {
    %c0_i32 = arith.constant 0 : i32
    %c0_i32_0 = arith.constant 0 : i32
    return %arg1, %arg0, %c0_i32 : i32, i32, i32
  }
  func.func @transform_3(%arg0: i32, %arg1: i32) -> (i32, i32, i32) {
    %c0_i32 = arith.constant 0 : i32
    %c0_i32_0 = arith.constant 0 : i32
    return %arg1, %arg0, %c0_i32 : i32, i32, i32
  }
  func.func @transform_4(%arg0: i32, %arg1: i32) -> (i32, i32) {
    %c0_i32 = arith.constant 0 : i32
    %c0_i32_0 = arith.constant 0 : i32
    %c0_i32_1 = arith.constant 0 : i32
    return %c0_i32, %c0_i32_0 : i32, i32
  }
  func.func @transform_5(%arg0: i32, %arg1: i32) -> (i32, i32) {
    %c0_i32 = arith.constant 0 : i32
    %c0_i32_0 = arith.constant 0 : i32
    %c0_i32_1 = arith.constant 0 : i32
    return %c0_i32, %c0_i32_0 : i32, i32
  }
  func.func @transform_6(%arg0: i32, %arg1: i32) -> (i32, i32) {
    %c0_i32 = arith.constant 0 : i32
    %c0_i32_0 = arith.constant 0 : i32
    %c0_i32_1 = arith.constant 0 : i32
    return %c0_i32, %c0_i32_0 : i32, i32
  }
  func.func @transform_7(%arg0: i32, %arg1: i32) -> (i32, i32) {
    %c0_i32 = arith.constant 0 : i32
    %c0_i32_0 = arith.constant 0 : i32
    %c0_i32_1 = arith.constant 0 : i32
    return %c0_i32, %c0_i32_0 : i32, i32
  }
  func.func @transform_8(%arg0: i32, %arg1: i32) -> (i32, i32) {
    %c0_i32 = arith.constant 0 : i32
    %c0_i32_0 = arith.constant 0 : i32
    %c0_i32_1 = arith.constant 0 : i32
    return %c0_i32, %c0_i32_0 : i32, i32
  }
  func.func @transform_9(%arg0: i32, %arg1: i32) -> (i32, i32) {
    %c0_i32 = arith.constant 0 : i32
    %c0_i32_0 = arith.constant 0 : i32
    %c0_i32_1 = arith.constant 0 : i32
    return %c0_i32, %c0_i32_0 : i32, i32
  }
  func.func @transform_10(%arg0: i32, %arg1: i32) -> (i32, i32) {
    %c0_i32 = arith.constant 0 : i32
    %c0_i32_0 = arith.constant 0 : i32
    return %arg0, %c0_i32 : i32, i32
  }
}

</mosaic_0001>

<llo_original>
// kernel: tpu_custom_call.1
$region0: #{tpu_custom_call.1}
  #allocation0 [shape = 'u32[]', space=smem, size = 0x4, offset = 0x4, fixed_abs, tag = 'smem constant byte address 0x4 - core index']
  #allocation1 [shape = 'u32[144,128]{1,0:T(1,128)}', space=vmem, size = 0x12000, scoped, tag = 'internal scratch']
  #allocation2 [shape = 'f32[8,128]{1,0:T(8,128)}', space=vmem, size = 0x1000, scoped, tag = 'scratch operand']
  #allocation3 [shape = 'f32[8,1]{1,0:T(8,128)}', space=vmem, size = 0x1000, scoped, tag = 'scratch operand']
  #allocation4 [shape = 'f32[8,1]{1,0:T(8,128)}', space=vmem, size = 0x1000, scoped, tag = 'scratch operand']
  #allocation5 [shape = 'f32[8,128]{1,0:T(8,128)}', space=vmem, size = 0x1000, scoped, tag = 'scratch operand']
  %s0 = inlined_call_operand.vmem [shape: f32[8,128], index: 0, kind: input, shape index: {}]
  %s1 = inlined_call_operand.hbm [shape: bf16[16,8,128], index: 1, kind: input, shape index: {}]
  %s2 = inlined_call_operand.hbm [shape: bf16[16,8,128], index: 2, kind: input, shape index: {}]
  %s3 = inlined_call_operand.vmem [shape: f32[16,8,1], index: 3, kind: input, shape index: {}]
  %s4 = inlined_call_operand.vmem [shape: f32[128,128], index: 4, kind: input, shape index: {}]
  %s5 = inlined_call_operand.vmem [shape: f32[1,128], index: 5, kind: input, shape index: {}]
  %s6 = inlined_call_operand.vmem [shape: f32[128,1], index: 6, kind: input, shape index: {}]
  %s7 = inlined_call_operand.vmem [shape: f32[128,128], index: 7, kind: input, shape index: {}]
  %s8 = inlined_call_operand.hbm [shape: f32[128,128], index: 8, kind: input, shape index: {}]
  %s9 = inlined_call_operand.vmem [shape: f32[1,128], index: 9, kind: input, shape index: {}]
  %s10 = inlined_call_operand.hbm [shape: f32[8,128], index: 10, kind: output, shape index: {}]
  %s11 = sld [smem:[#allocation0]]
  $region70: #{tpu_custom_call.1} parent=0
    _
  %s13 = ssub.s32 1, %s11
  %s14 = scalar_select 0, %s13, %s11
  $region1: #{tpu_custom_call.1} parent=0
    #allocation6 [shape = 'u8[32768]{0}', space=vmem, size = 0x8000, scoped, tag = 'input window, operand 1, single buffered']
    #allocation7 [shape = 's32[1]{0}', space=sflag, size = 0x4, scoped, tag = 'scoped memory for tpu_custom_call.1']
    #allocation8 [shape = 's32[1]{0}', space=sflag, size = 0x4, scoped, tag = 'scoped memory for tpu_custom_call.1']
    #allocation9 [shape = 'u8[32768]{0}', space=vmem, size = 0x8000, scoped, tag = 'input window, operand 2, single buffered']
    #allocation10 [shape = 's32[1]{0}', space=sflag, size = 0x4, scoped, tag = 'scoped memory for tpu_custom_call.1']
    #allocation11 [shape = 'u8[65536]{0}', space=vmem, size = 0x10000, scoped, tag = 'input window, operand 8, single buffered']
    #allocation12 [shape = 'u8[4096]{0}', space=vmem, size = 0x1000, scoped, tag = 'output window, operand 0, single buffered']
    %15 = vsyncpa [#allocation7], 0
    %16 = vsyncpa [#allocation10], 0
    %17 = vsyncpa [#allocation8], 0
    // Predicated region
    $region2: #{tpu_custom_call.1} parent=1 // pred_check
      _
    $region3: #{tpu_custom_call.1} parent=1 // pred_check_branch
      %19 = sbr.rel (0) target = $region5
    $region4: #{tpu_custom_call.1} parent=1 // pred_region
      _
    $region5: #{tpu_custom_call.1} parent=1 // pred_fallthru
      _
    // Predicated region
    $region6: #{tpu_custom_call.1} parent=1 // pred_check
      _
    $region7: #{tpu_custom_call.1} parent=1 // pred_check_branch
      %21 = sbr.rel (0) target = $region9
    $region8: #{tpu_custom_call.1} parent=1 // pred_region
      %s23 = ssub.s32 1024, 1024
      %24 = vsyncadd [#allocation7], %s23
      %s25 = sshll.u32 [#allocation6], 4
      %s26 = int_to_ptr.vmem [resolvable:$true] %s25
      %31 = dma.hbm_to_vmem [thread:$0]  %s1, 1024, %s26, [#allocation7], 64, 64, 4
    $region9: #{tpu_custom_call.1} parent=1 // pred_fallthru
      _
    // Predicated region
    $region10: #{tpu_custom_call.1} parent=1 // pred_check
      _
    $region11: #{tpu_custom_call.1} parent=1 // pred_check_branch
      %33 = sbr.rel (0) target = $region13
    $region12: #{tpu_custom_call.1} parent=1 // pred_region
      %s35 = ssub.s32 1024, 1024
      %36 = vsyncadd [#allocation10], %s35
      %s37 = sshll.u32 [#allocation9], 4
      %s38 = int_to_ptr.vmem [resolvable:$true] %s37
      %43 = dma.hbm_to_vmem [thread:$0]  %s2, 1024, %s38, [#allocation10], 64, 64, 4
    $region13: #{tpu_custom_call.1} parent=1 // pred_fallthru
      _
    // Predicated region
    $region14: #{tpu_custom_call.1} parent=1 // pred_check
      _
    $region15: #{tpu_custom_call.1} parent=1 // pred_check_branch
      %45 = sbr.rel (0) target = $region17
    $region16: #{tpu_custom_call.1} parent=1 // pred_region
      _
    $region17: #{tpu_custom_call.1} parent=1 // pred_fallthru
      _
    // Predicated region
    $region18: #{tpu_custom_call.1} parent=1 // pred_check
      _
    $region19: #{tpu_custom_call.1} parent=1 // pred_check_branch
      %47 = sbr.rel (0) target = $region21
    $region20: #{tpu_custom_call.1} parent=1 // pred_region
      _
    $region21: #{tpu_custom_call.1} parent=1 // pred_fallthru
      _
    // Predicated region
    $region22: #{tpu_custom_call.1} parent=1 // pred_check
      _
    $region23: #{tpu_custom_call.1} parent=1 // pred_check_branch
      %49 = sbr.rel (0) target = $region25
    $region24: #{tpu_custom_call.1} parent=1 // pred_region
      _
    $region25: #{tpu_custom_call.1} parent=1 // pred_fallthru
      _
    // Predicated region
    $region26: #{tpu_custom_call.1} parent=1 // pred_check
      _
    $region27: #{tpu_custom_call.1} parent=1 // pred_check_branch
      %51 = sbr.rel (0) target = $region29
    $region28: #{tpu_custom_call.1} parent=1 // pred_region
      _
    $region29: #{tpu_custom_call.1} parent=1 // pred_fallthru
      _
    // Predicated region
    $region30: #{tpu_custom_call.1} parent=1 // pred_check
      _
    $region31: #{tpu_custom_call.1} parent=1 // pred_check_branch
      %53 = sbr.rel (0) target = $region33
    $region32: #{tpu_custom_call.1} parent=1 // pred_region
      _
    $region33: #{tpu_custom_call.1} parent=1 // pred_fallthru
      _
    // Predicated region
    $region34: #{tpu_custom_call.1} parent=1 // pred_check
      _
    $region35: #{tpu_custom_call.1} parent=1 // pred_check_branch
      %55 = sbr.rel (0) target = $region37
    $region36: #{tpu_custom_call.1} parent=1 // pred_region
      %s57 = ssub.s32 2048, 2048
      %58 = vsyncadd [#allocation10], %s57
      %s59 = sshll.u32 [#allocation11], 4
      %s60 = int_to_ptr.vmem [resolvable:$true] %s59
      %65 = dma.hbm_to_vmem [thread:$0]  %s8, 2048, %s60, [#allocation10], 128, 128, 8
    $region37: #{tpu_custom_call.1} parent=1 // pred_fallthru
      _
    // Predicated region
    $region38: #{tpu_custom_call.1} parent=1 // pred_check
      _
    $region39: #{tpu_custom_call.1} parent=1 // pred_check_branch
      %67 = sbr.rel (0) target = $region41
    $region40: #{tpu_custom_call.1} parent=1 // pred_region
      _
    $region41: #{tpu_custom_call.1} parent=1 // pred_fallthru
      _
    // Predicated region
    $region42: #{tpu_custom_call.1} parent=1 // pred_check
      _
    $region43: #{tpu_custom_call.1} parent=1 // pred_check_branch
      %69 = sbr.rel (0) target = $region45
    $region44: #{tpu_custom_call.1} parent=1 // pred_region
      %70 = dma.done [#allocation7], 1024
    $region45: #{tpu_custom_call.1} parent=1 // pred_fallthru
      _
    // Predicated region
    $region46: #{tpu_custom_call.1} parent=1 // pred_check
      _
    $region47: #{tpu_custom_call.1} parent=1 // pred_check_branch
      %72 = sbr.rel (0) target = $region49
    $region48: #{tpu_custom_call.1} parent=1 // pred_region
      %73 = dma.done [#allocation10], 1024
    $region49: #{tpu_custom_call.1} parent=1 // pred_fallthru
      _
    // Predicated region
    $region50: #{tpu_custom_call.1} parent=1 // pred_check
      _
    $region51: #{tpu_custom_call.1} parent=1 // pred_check_branch
      %75 = sbr.rel (0) target = $region53
    $region52: #{tpu_custom_call.1} parent=1 // pred_region
      %76 = dma.done [#allocation10], 2048
    $region53: #{tpu_custom_call.1} parent=1 // pred_fallthru
      _
    %p77 = scmp.eq.s32.totalorder 0, 0
    // Predicated region
    $region54: #{tpu_custom_call.1} parent=1 // pred_check
      %p78 = pneg %p77
    $region55: #{tpu_custom_call.1} parent=1 // pred_check_branch
      %80 = sbr.rel (%p78) target = $region57
    $region56: #{tpu_custom_call.1} parent=1 // pred_region
      %v81 = vld [vmem:[%s0] sm:$0xff]
      %v82 = vld [vmem:[%s4] sm:$0xff]
      %v83 = vld [vmem:[%s4 + $0x8] sm:$0xff]
      %v84 = vld [vmem:[%s4 + $0x10] sm:$0xff]
      %v85 = vld [vmem:[%s4 + $0x18] sm:$0xff]
      %v86 = vld [vmem:[%s4 + $0x20] sm:$0xff]
      %v87 = vld [vmem:[%s4 + $0x28] sm:$0xff]
      %v88 = vld [vmem:[%s4 + $0x30] sm:$0xff]
      %v89 = vld [vmem:[%s4 + $0x38] sm:$0xff]
      %v90 = vld [vmem:[%s4 + $0x40] sm:$0xff]
      %v91 = vld [vmem:[%s4 + $0x48] sm:$0xff]
      %v92 = vld [vmem:[%s4 + $0x50] sm:$0xff]
      %v93 = vld [vmem:[%s4 + $0x58] sm:$0xff]
      %v94 = vld [vmem:[%s4 + $0x60] sm:$0xff]
      %v95 = vld [vmem:[%s4 + $0x68] sm:$0xff]
      %v96 = vld [vmem:[%s4 + $0x70] sm:$0xff]
      %v97 = vld [vmem:[%s4 + $0x78] sm:$0xff]
      %v98 = vld [vmem:[%s5] sm:$0x1]
      %v100 = vlaneseq
      %v101 = vshrl.u32 %v100, 7
      %v102 = vsub.s32 0, %v101
      %v103 = vrot.slane %v98, %v102
      %105 = vmatprep.subr.mxu0 0.0
      %106 = vmatpush1.msra.mxu0 %v97
      %107 = vmatprep.subr.mxu0 0.0
      %108 = vmatpush1.msra.mxu0 %v96
      %109 = vmatprep.subr.mxu0 0.0
      %110 = vmatpush1.msra.mxu0 %v95
      %111 = vmatprep.subr.mxu0 0.0
      %112 = vmatpush1.msra.mxu0 %v94
      %113 = vmatprep.subr.mxu0 0.0
      %114 = vmatpush1.msra.mxu0 %v93
      %115 = vmatprep.subr.mxu0 0.0
      %116 = vmatpush1.msra.mxu0 %v92
      %117 = vmatprep.subr.mxu0 0.0
      %118 = vmatpush1.msra.mxu0 %v91
      %119 = vmatprep.subr.mxu0 0.0
      %120 = vmatpush1.msra.mxu0 %v90
      %121 = vmatprep.subr.mxu0 0.0
      %122 = vmatpush1.msra.mxu0 %v89
      %123 = vmatprep.subr.mxu0 0.0
      %124 = vmatpush1.msra.mxu0 %v88
      %125 = vmatprep.subr.mxu0 0.0
      %126 = vmatpush1.msra.mxu0 %v87
      %127 = vmatprep.subr.mxu0 0.0
      %128 = vmatpush1.msra.mxu0 %v86
      %129 = vmatprep.subr.mxu0 0.0
      %130 = vmatpush1.msra.mxu0 %v85
      %131 = vmatprep.subr.mxu0 0.0
      %132 = vmatpush1.msra.mxu0 %v84
      %133 = vmatprep.subr.mxu0 0.0
      %134 = vmatpush1.msra.mxu0 %v83
      %135 = vmatprep.subr.mxu0 0.0
      %136 = vmatpush1.msra.mxu0 %v82
      %137 = vmatprep.subr.mxu0 0.0
      %138 = vmatpush2.msra.mxu0 0.0
      %139 = vmatprep.subr.mxu0 0.0
      %140 = vmatpush2.msra.mxu0 0.0
      %141 = vmatprep.subr.mxu0 0.0
      %142 = vmatpush2.msra.mxu0 0.0
      %143 = vmatprep.subr.mxu0 0.0
      %144 = vmatpush2.msra.mxu0 0.0
      %145 = vmatprep.subr.mxu0 0.0
      %146 = vmatpush2.msra.mxu0 0.0
      %147 = vmatprep.subr.mxu0 0.0
      %148 = vmatpush2.msra.mxu0 0.0
      %149 = vmatprep.subr.mxu0 0.0
      %150 = vmatpush2.msra.mxu0 0.0
      %151 = vmatprep.subr.mxu0 0.0
      %152 = vmatpush2.msra.mxu0 0.0
      %153 = vmatprep.subr.mxu0 0.0
      %154 = vmatpush2.msra.mxu0 0.0
      %155 = vmatprep.subr.mxu0 0.0
      %156 = vmatpush2.msra.mxu0 0.0
      %157 = vmatprep.subr.mxu0 0.0
      %158 = vmatpush2.msra.mxu0 0.0
      %159 = vmatprep.subr.mxu0 0.0
      %160 = vmatpush2.msra.mxu0 0.0
      %161 = vmatprep.subr.mxu0 0.0
      %162 = vmatpush2.msra.mxu0 0.0
      %163 = vmatprep.subr.mxu0 0.0
      %164 = vmatpush2.msra.mxu0 0.0
      %165 = vmatprep.subr.mxu0 0.0
      %166 = vmatpush2.msra.mxu0 0.0
      %167 = vmatprep.subr.mxu0 0.0
      %168 = vmatpush2.msra.mxu0 0.0
      %169 = vmatprep.mubr.f32.mxu0 0.0
      %170 = vmatmul.mubr.f32.gmra.mxu0 %v81
      %v171 = vpop.f32.mrf.mxu0
      %v172 = vadd.f32 %v103, %v171
      %v173 = vpop.f32.mrf.mxu0
      %174 = vdwg.mxu0
      %175 = vst [vmem:[#allocation2] sm:$0xff] %v172
      %vm176 = vcmask 7168
      %177 = vst.msk [vmem:[#allocation3] sm:$0xff] %vm176, -inf
      %178 = vst.msk [vmem:[#allocation4] sm:$0xff] %vm176, 0.0
      %179 = vst [vmem:[#allocation5] sm:$0xff] 0.0
    $region57: #{tpu_custom_call.1} parent=1 // pred_fallthru
      _
    %v180 = vld [vmem:[#allocation9] sm:$0xf]
    %v181 = vld [vmem:[#allocation9 + $0x4] sm:$0xf]
    %v182 = vld [vmem:[#allocation9 + $0x8] sm:$0xf]
    %v183 = vld [vmem:[#allocation9 + $0xc] sm:$0xf]
    %v184 = vld [vmem:[#allocation9 + $0x10] sm:$0xf]
    %v185 = vld [vmem:[#allocation9 + $0x14] sm:$0xf]
    %v186 = vld [vmem:[#allocation9 + $0x18] sm:$0xf]
    %v187 = vld [vmem:[#allocation9 + $0x1c] sm:$0xf]
    %v188 = vld [vmem:[#allocation9 + $0x20] sm:$0xf]
    %v189 = vld [vmem:[#allocation9 + $0x24] sm:$0xf]
    %v190 = vld [vmem:[#allocation9 + $0x28] sm:$0xf]
    %v191 = vld [vmem:[#allocation9 + $0x2c] sm:$0xf]
    %v192 = vld [vmem:[#allocation9 + $0x30] sm:$0xf]
    %v193 = vld [vmem:[#allocation9 + $0x34] sm:$0xf]
    %v194 = vld [vmem:[#allocation9 + $0x38] sm:$0xf]
    %v195 = vld [vmem:[#allocation9 + $0x3c] sm:$0xf]
    %v196 = vunpack.c.l.bf16 %v180
    %v197 = vunpack.c.l.bf16 %v181
    %v198 = vunpack.c.l.bf16 %v182
    %v199 = vunpack.c.l.bf16 %v183
    %v200 = vunpack.c.l.bf16 %v184
    %v201 = vunpack.c.l.bf16 %v185
    %v202 = vunpack.c.l.bf16 %v186
    %v203 = vunpack.c.l.bf16 %v187
    %v204 = vunpack.c.l.bf16 %v188
    %v205 = vunpack.c.l.bf16 %v189
    %v206 = vunpack.c.l.bf16 %v190
    %v207 = vunpack.c.l.bf16 %v191
    %v208 = vunpack.c.l.bf16 %v192
    %v209 = vunpack.c.l.bf16 %v193
    %v210 = vunpack.c.l.bf16 %v194
    %v211 = vunpack.c.l.bf16 %v195
    %v212 = vld [vmem:[#allocation2] sm:$0xff]
    %v213 = vadd.f32 %v196, %v212
    %v214 = vadd.f32 %v197, %v212
    %v215 = vadd.f32 %v198, %v212
    %v216 = vadd.f32 %v199, %v212
    %v217 = vadd.f32 %v200, %v212
    %v218 = vadd.f32 %v201, %v212
    %v219 = vadd.f32 %v202, %v212
    %v220 = vadd.f32 %v203, %v212
    %v221 = vadd.f32 %v204, %v212
    %v222 = vadd.f32 %v205, %v212
    %v223 = vadd.f32 %v206, %v212
    %v224 = vadd.f32 %v207, %v212
    %v225 = vadd.f32 %v208, %v212
    %v226 = vadd.f32 %v209, %v212
    %v227 = vadd.f32 %v210, %v212
    %v228 = vadd.f32 %v211, %v212
    %v229 = vtanh.pop %v213
    %v230 = vtanh.pop %v214
    %v231 = vtanh.pop %v215
    %v232 = vtanh.pop %v216
    %v233 = vtanh.pop %v217
    %v234 = vtanh.pop %v218
    %v235 = vtanh.pop %v219
    %v236 = vtanh.pop %v220
    %v237 = vtanh.pop %v221
    %v238 = vtanh.pop %v222
    %v239 = vtanh.pop %v223
    %v240 = vtanh.pop %v224
    %v241 = vtanh.pop %v225
    %v242 = vtanh.pop %v226
    %v243 = vtanh.pop %v227
    %v244 = vtanh.pop %v228
    %v245 = vld [vmem:[%s6] sm:$0xff]
    %v246 = vld [vmem:[%s6 + $0x8] sm:$0xff]
    %v247 = vld [vmem:[%s6 + $0x10] sm:$0xff]
    %v248 = vld [vmem:[%s6 + $0x18] sm:$0xff]
    %v249 = vld [vmem:[%s6 + $0x20] sm:$0xff]
    %v250 = vld [vmem:[%s6 + $0x28] sm:$0xff]
    %v251 = vld [vmem:[%s6 + $0x30] sm:$0xff]
    %v252 = vld [vmem:[%s6 + $0x38] sm:$0xff]
    %v253 = vld [vmem:[%s6 + $0x40] sm:$0xff]
    %v254 = vld [vmem:[%s6 + $0x48] sm:$0xff]
    %v255 = vld [vmem:[%s6 + $0x50] sm:$0xff]
    %v256 = vld [vmem:[%s6 + $0x58] sm:$0xff]
    %v257 = vld [vmem:[%s6 + $0x60] sm:$0xff]
    %v258 = vld [vmem:[%s6 + $0x68] sm:$0xff]
    %v259 = vld [vmem:[%s6 + $0x70] sm:$0xff]
    %v260 = vld [vmem:[%s6 + $0x78] sm:$0xff]
    %261 = vmatprep.subr.mxu0 0.0
    %262 = vmatpush1.msra.mxu0 %v260
    %263 = vmatprep.subr.mxu0 0.0
    %264 = vmatpush1.msra.mxu0 %v259
    %265 = vmatprep.subr.mxu0 0.0
    %266 = vmatpush1.msra.mxu0 %v258
    %267 = vmatprep.subr.mxu0 0.0
    %268 = vmatpush1.msra.mxu0 %v257
    %269 = vmatprep.subr.mxu0 0.0
    %270 = vmatpush1.msra.mxu0 %v256
    %271 = vmatprep.subr.mxu0 0.0
    %272 = vmatpush1.msra.mxu0 %v255
    %273 = vmatprep.subr.mxu0 0.0
    %274 = vmatpush1.msra.mxu0 %v254
    %275 = vmatprep.subr.mxu0 0.0
    %276 = vmatpush1.msra.mxu0 %v253
    %277 = vmatprep.subr.mxu0 0.0
    %278 = vmatpush1.msra.mxu0 %v252
    %279 = vmatprep.subr.mxu0 0.0
    %280 = vmatpush1.msra.mxu0 %v251
    %281 = vmatprep.subr.mxu0 0.0
    %282 = vmatpush1.msra.mxu0 %v250
    %283 = vmatprep.subr.mxu0 0.0
    %284 = vmatpush1.msra.mxu0 %v249
    %285 = vmatprep.subr.mxu0 0.0
    %286 = vmatpush1.msra.mxu0 %v248
    %287 = vmatprep.subr.mxu0 0.0
    %288 = vmatpush1.msra.mxu0 %v247
    %289 = vmatprep.subr.mxu0 0.0
    %290 = vmatpush1.msra.mxu0 %v246
    %291 = vmatprep.subr.mxu0 0.0
    %292 = vmatpush1.msra.mxu0 %v245
    %293 = vmatprep.subr.mxu0 0.0
    %294 = vmatpush2.msra.mxu0 0.0
    %295 = vmatprep.subr.mxu0 0.0
    %296 = vmatpush2.msra.mxu0 0.0
    %297 = vmatprep.subr.mxu0 0.0
    %298 = vmatpush2.msra.mxu0 0.0
    %299 = vmatprep.subr.mxu0 0.0
    %300 = vmatpush2.msra.mxu0 0.0
    %301 = vmatprep.subr.mxu0 0.0
    %302 = vmatpush2.msra.mxu0 0.0
    %303 = vmatprep.subr.mxu0 0.0
    %304 = vmatpush2.msra.mxu0 0.0
    %305 = vmatprep.subr.mxu0 0.0
    %306 = vmatpush2.msra.mxu0 0.0
    %307 = vmatprep.subr.mxu0 0.0
    %308 = vmatpush2.msra.mxu0 0.0
    %309 = vmatprep.subr.mxu0 0.0
    %310 = vmatpush2.msra.mxu0 0.0
    %311 = vmatprep.subr.mxu0 0.0
    %312 = vmatpush2.msra.mxu0 0.0
    %313 = vmatprep.subr.mxu0 0.0
    %314 = vmatpush2.msra.mxu0 0.0
    %315 = vmatprep.subr.mxu0 0.0
    %316 = vmatpush2.msra.mxu0 0.0
    %317 = vmatprep.subr.mxu0 0.0
    %318 = vmatpush2.msra.mxu0 0.0
    %319 = vmatprep.subr.mxu0 0.0
    %320 = vmatpush2.msra.mxu0 0.0
    %321 = vmatprep.subr.mxu0 0.0
    %322 = vmatpush2.msra.mxu0 0.0
    %323 = vmatprep.subr.mxu0 0.0
    %324 = vmatpush2.msra.mxu0 0.0
    %325 = vmatprep.mubr.f32.mxu0 0.0
    %326 = vmatmul.mubr.f32.gmra.mxu0 %v229
    %v327 = vpop.f32.mrf.mxu0
    %v328 = vadd.f32 0.0, %v327
    %v329 = vpop.f32.mrf.mxu0
    %330 = vmatprep.mubr.f32.mxu0 0.0
    %331 = vmatmul.mubr.f32.gmra.mxu0 %v230
    %v332 = vpop.f32.mrf.mxu0
    %v333 = vadd.f32 0.0, %v332
    %v334 = vpop.f32.mrf.mxu0
    %335 = vmatprep.mubr.f32.mxu0 0.0
    %336 = vmatmul.mubr.f32.gmra.mxu0 %v231
    %v337 = vpop.f32.mrf.mxu0
    %v338 = vadd.f32 0.0, %v337
    %v339 = vpop.f32.mrf.mxu0
    %340 = vmatprep.mubr.f32.mxu0 0.0
    %341 = vmatmul.mubr.f32.gmra.mxu0 %v232
    %v342 = vpop.f32.mrf.mxu0
    %v343 = vadd.f32 0.0, %v342
    %v344 = vpop.f32.mrf.mxu0
    %345 = vmatprep.mubr.f32.mxu0 0.0
    %346 = vmatmul.mubr.f32.gmra.mxu0 %v233
    %v347 = vpop.f32.mrf.mxu0
    %v348 = vadd.f32 0.0, %v347
    %v349 = vpop.f32.mrf.mxu0
    %350 = vmatprep.mubr.f32.mxu0 0.0
    %351 = vmatmul.mubr.f32.gmra.mxu0 %v234
    %v352 = vpop.f32.mrf.mxu0
    %v353 = vadd.f32 0.0, %v352
    %v354 = vpop.f32.mrf.mxu0
    %355 = vmatprep.mubr.f32.mxu0 0.0
    %356 = vmatmul.mubr.f32.gmra.mxu0 %v235
    %v357 = vpop.f32.mrf.mxu0
    %v358 = vadd.f32 0.0, %v357
    %v359 = vpop.f32.mrf.mxu0
    %360 = vmatprep.mubr.f32.mxu0 0.0
    %361 = vmatmul.mubr.f32.gmra.mxu0 %v236
    %v362 = vpop.f32.mrf.mxu0
    %v363 = vadd.f32 0.0, %v362
    %v364 = vpop.f32.mrf.mxu0
    %365 = vmatprep.mubr.f32.mxu0 0.0
    %366 = vmatmul.mubr.f32.gmra.mxu0 %v237
    %v367 = vpop.f32.mrf.mxu0
    %v368 = vadd.f32 0.0, %v367
    %v369 = vpop.f32.mrf.mxu0
    %370 = vmatprep.mubr.f32.mxu0 0.0
    %371 = vmatmul.mubr.f32.gmra.mxu0 %v238
    %v372 = vpop.f32.mrf.mxu0
    %v373 = vadd.f32 0.0, %v372
    %v374 = vpop.f32.mrf.mxu0
    %375 = vmatprep.mubr.f32.mxu0 0.0
    %376 = vmatmul.mubr.f32.gmra.mxu0 %v239
    %v377 = vpop.f32.mrf.mxu0
    %v378 = vadd.f32 0.0, %v377
    %v379 = vpop.f32.mrf.mxu0
    %380 = vmatprep.mubr.f32.mxu0 0.0
    %381 = vmatmul.mubr.f32.gmra.mxu0 %v240
    %v382 = vpop.f32.mrf.mxu0
    %v383 = vadd.f32 0.0, %v382
    %v384 = vpop.f32.mrf.mxu0
    %385 = vmatprep.mubr.f32.mxu0 0.0
    %386 = vmatmul.mubr.f32.gmra.mxu0 %v241
    %v387 = vpop.f32.mrf.mxu0
    %v388 = vadd.f32 0.0, %v387
    %v389 = vpop.f32.mrf.mxu0
    %390 = vmatprep.mubr.f32.mxu0 0.0
    %391 = vmatmul.mubr.f32.gmra.mxu0 %v242
    %v392 = vpop.f32.mrf.mxu0
    %v393 = vadd.f32 0.0, %v392
    %v394 = vpop.f32.mrf.mxu0
    %395 = vmatprep.mubr.f32.mxu0 0.0
    %396 = vmatmul.mubr.f32.gmra.mxu0 %v243
    %v397 = vpop.f32.mrf.mxu0
    %v398 = vadd.f32 0.0, %v397
    %v399 = vpop.f32.mrf.mxu0
    %400 = vmatprep.mubr.f32.mxu0 0.0
    %401 = vmatmul.mubr.f32.gmra.mxu0 %v244
    %v402 = vpop.f32.mrf.mxu0
    %v403 = vadd.f32 0.0, %v402
    %v404 = vpop.f32.mrf.mxu0
    %405 = vdwg.mxu0
    %s406 = smul.u32 0, 16
    %v407 = vstv %s406
    %v408 = vadd.s32 %v407, 1
    %v409 = vadd.s32 %v407, 2
    %v410 = vadd.s32 %v407, 3
    %v411 = vadd.s32 %v407, 4
    %v412 = vadd.s32 %v407, 5
    %v413 = vadd.s32 %v407, 6
    %v414 = vadd.s32 %v407, 7
    %v415 = vadd.s32 %v407, 8
    %v416 = vadd.s32 %v407, 9
    %v417 = vadd.s32 %v407, 10
    %v418 = vadd.s32 %v407, 11
    %v419 = vadd.s32 %v407, 12
    %v420 = vadd.s32 %v407, 13
    %v421 = vadd.s32 %v407, 14
    %v422 = vadd.s32 %v407, 15
    %vm423 = vcmp.lt.s32.totalorder %v407, 10
    %vm424 = vcmp.lt.s32.totalorder %v408, 10
    %vm425 = vcmp.lt.s32.totalorder %v409, 10
    %vm426 = vcmp.lt.s32.totalorder %v410, 10
    %vm427 = vcmp.lt.s32.totalorder %v411, 10
    %vm428 = vcmp.lt.s32.totalorder %v412, 10
    %vm429 = vcmp.lt.s32.totalorder %v413, 10
    %vm430 = vcmp.lt.s32.totalorder %v414, 10
    %vm431 = vcmp.lt.s32.totalorder %v415, 10
    %vm432 = vcmp.lt.s32.totalorder %v416, 10
    %vm433 = vcmp.lt.s32.totalorder %v417, 10
    %vm434 = vcmp.lt.s32.totalorder %v418, 10
    %vm435 = vcmp.lt.s32.totalorder %v419, 10
    %vm436 = vcmp.lt.s32.totalorder %v420, 10
    %vm437 = vcmp.lt.s32.totalorder %v421, 10
    %vm438 = vcmp.lt.s32.totalorder %v422, 10
    %v439 = vsel %vm423, %v328, -1e+30
    %v440 = vsel %vm424, %v333, -1e+30
    %v441 = vsel %vm425, %v338, -1e+30
    %v442 = vsel %vm426, %v343, -1e+30
    %v443 = vsel %vm427, %v348, -1e+30
    %v444 = vsel %vm428, %v353, -1e+30
    %v445 = vsel %vm429, %v358, -1e+30
    %v446 = vsel %vm430, %v363, -1e+30
    %v447 = vsel %vm431, %v368, -1e+30
    %v448 = vsel %vm432, %v373, -1e+30
    %v449 = vsel %vm433, %v378, -1e+30
    %v450 = vsel %vm434, %v383, -1e+30
    %v451 = vsel %vm435, %v388, -1e+30
    %v452 = vsel %vm436, %v393, -1e+30
    %v453 = vsel %vm437, %v398, -1e+30
    %v454 = vsel %vm438, %v403, -1e+30
    %v455 = vld [vmem:[#allocation3] sm:$0xff]
    %vm456 = vcmask 7168
    %v457 = vsel %vm456, %v439, -inf
    %v458 = vsel %vm456, %v440, -inf
    %v459 = vsel %vm456, %v441, -inf
    %v460 = vsel %vm456, %v442, -inf
    %v461 = vsel %vm456, %v443, -inf
    %v462 = vmax.f32 %v457, %v461
    %v463 = vsel %vm456, %v444, -inf
    %v464 = vmax.f32 %v458, %v463
    %v465 = vsel %vm456, %v445, -inf
    %v466 = vmax.f32 %v459, %v465
    %v467 = vsel %vm456, %v446, -inf
    %v468 = vmax.f32 %v460, %v467
    %v469 = vsel %vm456, %v447, -inf
    %v470 = vmax.f32 %v462, %v469
    %v471 = vsel %vm456, %v448, -inf
    %v472 = vmax.f32 %v464, %v471
    %v473 = vsel %vm456, %v449, -inf
    %v474 = vmax.f32 %v466, %v473
    %v475 = vsel %vm456, %v450, -inf
    %v476 = vmax.f32 %v468, %v475
    %v477 = vsel %vm456, %v451, -inf
    %v478 = vmax.f32 %v470, %v477
    %v479 = vsel %vm456, %v452, -inf
    %v480 = vmax.f32 %v472, %v479
    %v481 = vsel %vm456, %v453, -inf
    %v482 = vmax.f32 %v474, %v481
    %v483 = vsel %vm456, %v454, -inf
    %v484 = vmax.f32 %v476, %v483
    %v485 = vmax.f32 %v478, %v480
    %v486 = vmax.f32 %v482, %v484
    %v487 = vmax.f32 %v485, %v486
    %v488 = vmax.f32 %v455, %v487
    %v489 = vsub.f32 %v455, %v488
    %v490 = vmul.f32 %v489, 1.442695
    %v491 = vpow.pop %v490
    %v492 = vsub.f32 %v439, %v488
    %v493 = vsub.f32 %v440, %v488
    %v494 = vsub.f32 %v441, %v488
    %v495 = vsub.f32 %v442, %v488
    %v496 = vsub.f32 %v443, %v488
    %v497 = vsub.f32 %v444, %v488
    %v498 = vsub.f32 %v445, %v488
    %v499 = vsub.f32 %v446, %v488
    %v500 = vsub.f32 %v447, %v488
    %v501 = vsub.f32 %v448, %v488
    %v502 = vsub.f32 %v449, %v488
    %v503 = vsub.f32 %v450, %v488
    %v504 = vsub.f32 %v451, %v488
    %v505 = vsub.f32 %v452, %v488
    %v506 = vsub.f32 %v453, %v488
    %v507 = vsub.f32 %v454, %v488
    %v508 = vmul.f32 %v492, 1.442695
    %v509 = vpow.pop %v508
    %v510 = vmul.f32 %v493, 1.442695
    %v511 = vpow.pop %v510
    %v512 = vmul.f32 %v494, 1.442695
    %v513 = vpow.pop %v512
    %v514 = vmul.f32 %v495, 1.442695
    %v515 = vpow.pop %v514
    %v516 = vmul.f32 %v496, 1.442695
    %v517 = vpow.pop %v516
    %v518 = vmul.f32 %v497, 1.442695
    %v519 = vpow.pop %v518
    %v520 = vmul.f32 %v498, 1.442695
    %v521 = vpow.pop %v520
    %v522 = vmul.f32 %v499, 1.442695
    %v523 = vpow.pop %v522
    %v524 = vmul.f32 %v500, 1.442695
    %v525 = vpow.pop %v524
    %v526 = vmul.f32 %v501, 1.442695
    %v527 = vpow.pop %v526
    %v528 = vmul.f32 %v502, 1.442695
    %v529 = vpow.pop %v528
    %v530 = vmul.f32 %v503, 1.442695
    %v531 = vpow.pop %v530
    %v532 = vmul.f32 %v504, 1.442695
    %v533 = vpow.pop %v532
    %v534 = vmul.f32 %v505, 1.442695
    %v535 = vpow.pop %v534
    %v536 = vmul.f32 %v506, 1.442695
    %v537 = vpow.pop %v536
    %v538 = vmul.f32 %v507, 1.442695
    %v539 = vpow.pop %v538
    %v540 = vld [vmem:[#allocation4] sm:$0xff]
    %v541 = vmul.f32 %v491, %v540
    %v542 = vsel %vm456, %v509, 0.0
    %v543 = vsel %vm456, %v511, 0.0
    %v544 = vadd.f32 %v542, %v543
    %v545 = vsel %vm456, %v513, 0.0
    %v546 = vadd.f32 %v544, %v545
    %v547 = vsel %vm456, %v515, 0.0
    %v548 = vadd.f32 %v546, %v547
    %v549 = vsel %vm456, %v517, 0.0
    %v550 = vadd.f32 %v548, %v549
    %v551 = vsel %vm456, %v519, 0.0
    %v552 = vadd.f32 %v550, %v551
    %v553 = vsel %vm456, %v521, 0.0
    %v554 = vadd.f32 %v552, %v553
    %v555 = vsel %vm456, %v523, 0.0
    %v556 = vadd.f32 %v554, %v555
    %v557 = vsel %vm456, %v525, 0.0
    %v558 = vadd.f32 %v556, %v557
    %v559 = vsel %vm456, %v527, 0.0
    %v560 = vadd.f32 %v558, %v559
    %v561 = vsel %vm456, %v529, 0.0
    %v562 = vadd.f32 %v560, %v561
    %v563 = vsel %vm456, %v531, 0.0
    %v564 = vadd.f32 %v562, %v563
    %v565 = vsel %vm456, %v533, 0.0
    %v566 = vadd.f32 %v564, %v565
    %v567 = vsel %vm456, %v535, 0.0
    %v568 = vadd.f32 %v566, %v567
    %v569 = vsel %vm456, %v537, 0.0
    %v570 = vadd.f32 %v568, %v569
    %v571 = vsel %vm456, %v539, 0.0
    %v572 = vadd.f32 %v570, %v571
    %v573 = vadd.f32 %v541, %v572
    %574 = vst.msk [vmem:[#allocation4] sm:$0xff] %vm456, %v573
    %v575 = vld [vmem:[%s3] sm:$0xff]
    %v576 = vld [vmem:[%s3 + $0x8] sm:$0xff]
    %v577 = vld [vmem:[%s3 + $0x10] sm:$0xff]
    %v578 = vld [vmem:[%s3 + $0x18] sm:$0xff]
    %v579 = vld [vmem:[%s3 + $0x20] sm:$0xff]
    %v580 = vld [vmem:[%s3 + $0x28] sm:$0xff]
    %v581 = vld [vmem:[%s3 + $0x30] sm:$0xff]
    %v582 = vld [vmem:[%s3 + $0x38] sm:$0xff]
    %v583 = vld [vmem:[%s3 + $0x40] sm:$0xff]
    %v584 = vld [vmem:[%s3 + $0x48] sm:$0xff]
    %v585 = vld [vmem:[%s3 + $0x50] sm:$0xff]
    %v586 = vld [vmem:[%s3 + $0x58] sm:$0xff]
    %v587 = vld [vmem:[%s3 + $0x60] sm:$0xff]
    %v588 = vld [vmem:[%s3 + $0x68] sm:$0xff]
    %v589 = vld [vmem:[%s3 + $0x70] sm:$0xff]
    %v590 = vld [vmem:[%s3 + $0x78] sm:$0xff]
    %v591 = vmul.f32 %v509, %v575
    %v592 = vmul.f32 %v511, %v576
    %v593 = vmul.f32 %v513, %v577
    %v594 = vmul.f32 %v515, %v578
    %v595 = vmul.f32 %v517, %v579
    %v596 = vmul.f32 %v519, %v580
    %v597 = vmul.f32 %v521, %v581
    %v598 = vmul.f32 %v523, %v582
    %v599 = vmul.f32 %v525, %v583
    %v600 = vmul.f32 %v527, %v584
    %v601 = vmul.f32 %v529, %v585
    %v602 = vmul.f32 %v531, %v586
    %v603 = vmul.f32 %v533, %v587
    %v604 = vmul.f32 %v535, %v588
    %v605 = vmul.f32 %v537, %v589
    %v606 = vmul.f32 %v539, %v590
    %v607 = vld [vmem:[#allocation5] sm:$0xff]
    %609 = vset.pattern.permute.xlu0 0
    %610 = vperm.xlu0 %609, %v491
    %v611 = vpop.permute.xlu0 %610
    %v613 = vmul.f32 %v611, %v607
    %v614 = vld [vmem:[#allocation6] sm:$0xf]
    %v615 = vld [vmem:[#allocation6 + $0x4] sm:$0xf]
    %v616 = vld [vmem:[#allocation6 + $0x8] sm:$0xf]
    %v617 = vld [vmem:[#allocation6 + $0xc] sm:$0xf]
    %v618 = vld [vmem:[#allocation6 + $0x10] sm:$0xf]
    %v619 = vld [vmem:[#allocation6 + $0x14] sm:$0xf]
    %v620 = vld [vmem:[#allocation6 + $0x18] sm:$0xf]
    %v621 = vld [vmem:[#allocation6 + $0x1c] sm:$0xf]
    %v622 = vld [vmem:[#allocation6 + $0x20] sm:$0xf]
    %v623 = vld [vmem:[#allocation6 + $0x24] sm:$0xf]
    %v624 = vld [vmem:[#allocation6 + $0x28] sm:$0xf]
    %v625 = vld [vmem:[#allocation6 + $0x2c] sm:$0xf]
    %v626 = vld [vmem:[#allocation6 + $0x30] sm:$0xf]
    %v627 = vld [vmem:[#allocation6 + $0x34] sm:$0xf]
    %v628 = vld [vmem:[#allocation6 + $0x38] sm:$0xf]
    %v629 = vld [vmem:[#allocation6 + $0x3c] sm:$0xf]
    %v630 = vunpack.c.l.bf16 %v614
    %v631 = vunpack.c.l.bf16 %v615
    %v632 = vunpack.c.l.bf16 %v616
    %v633 = vunpack.c.l.bf16 %v617
    %v634 = vunpack.c.l.bf16 %v618
    %v635 = vunpack.c.l.bf16 %v619
    %v636 = vunpack.c.l.bf16 %v620
    %v637 = vunpack.c.l.bf16 %v621
    %v638 = vunpack.c.l.bf16 %v622
    %v639 = vunpack.c.l.bf16 %v623
    %v640 = vunpack.c.l.bf16 %v624
    %v641 = vunpack.c.l.bf16 %v625
    %v642 = vunpack.c.l.bf16 %v626
    %v643 = vunpack.c.l.bf16 %v627
    %v644 = vunpack.c.l.bf16 %v628
    %v645 = vunpack.c.l.bf16 %v629
    %647 = vset.pattern.permute.xlu0 0
    %648 = vperm.xlu0 %647, %v591
    %v649 = vpop.permute.xlu0 %648
    %652 = vset.pattern.permute.xlu0 0
    %653 = vperm.xlu0 %652, %v592
    %v654 = vpop.permute.xlu0 %653
    %657 = vset.pattern.permute.xlu0 0
    %658 = vperm.xlu0 %657, %v593
    %v659 = vpop.permute.xlu0 %658
    %662 = vset.pattern.permute.xlu0 0
    %663 = vperm.xlu0 %662, %v594
    %v664 = vpop.permute.xlu0 %663
    %667 = vset.pattern.permute.xlu0 0
    %668 = vperm.xlu0 %667, %v595
    %v669 = vpop.permute.xlu0 %668
    %672 = vset.pattern.permute.xlu0 0
    %673 = vperm.xlu0 %672, %v596
    %v674 = vpop.permute.xlu0 %673
    %677 = vset.pattern.permute.xlu0 0
    %678 = vperm.xlu0 %677, %v597
    %v679 = vpop.permute.xlu0 %678
    %682 = vset.pattern.permute.xlu0 0
    %683 = vperm.xlu0 %682, %v598
    %v684 = vpop.permute.xlu0 %683
    %687 = vset.pattern.permute.xlu0 0
    %688 = vperm.xlu0 %687, %v599
    %v689 = vpop.permute.xlu0 %688
    %692 = vset.pattern.permute.xlu0 0
    %693 = vperm.xlu0 %692, %v600
    %v694 = vpop.permute.xlu0 %693
    %697 = vset.pattern.permute.xlu0 0
    %698 = vperm.xlu0 %697, %v601
    %v699 = vpop.permute.xlu0 %698
    %702 = vset.pattern.permute.xlu0 0
    %703 = vperm.xlu0 %702, %v602
    %v704 = vpop.permute.xlu0 %703
    %707 = vset.pattern.permute.xlu0 0
    %708 = vperm.xlu0 %707, %v603
    %v709 = vpop.permute.xlu0 %708
    %712 = vset.pattern.permute.xlu0 0
    %713 = vperm.xlu0 %712, %v604
    %v714 = vpop.permute.xlu0 %713
    %717 = vset.pattern.permute.xlu0 0
    %718 = vperm.xlu0 %717, %v605
    %v719 = vpop.permute.xlu0 %718
    %722 = vset.pattern.permute.xlu0 0
    %723 = vperm.xlu0 %722, %v606
    %v724 = vpop.permute.xlu0 %723
    %v726 = vmul.f32 %v649, %v630
    %v727 = vmul.f32 %v654, %v631
    %v728 = vmul.f32 %v659, %v632
    %v729 = vmul.f32 %v664, %v633
    %v730 = vmul.f32 %v669, %v634
    %v731 = vmul.f32 %v674, %v635
    %v732 = vmul.f32 %v679, %v636
    %v733 = vmul.f32 %v684, %v637
    %v734 = vmul.f32 %v689, %v638
    %v735 = vmul.f32 %v694, %v639
    %v736 = vmul.f32 %v699, %v640
    %v737 = vmul.f32 %v704, %v641
    %v738 = vmul.f32 %v709, %v642
    %v739 = vmul.f32 %v714, %v643
    %v740 = vmul.f32 %v719, %v644
    %v741 = vmul.f32 %v724, %v645
    %v742 = vadd.f32 %v726, %v727
    %v743 = vadd.f32 %v742, %v728
    %v744 = vadd.f32 %v743, %v729
    %v745 = vadd.f32 %v744, %v730
    %v746 = vadd.f32 %v745, %v731
    %v747 = vadd.f32 %v746, %v732
    %v748 = vadd.f32 %v747, %v733
    %v749 = vadd.f32 %v748, %v734
    %v750 = vadd.f32 %v749, %v735
    %v751 = vadd.f32 %v750, %v736
    %v752 = vadd.f32 %v751, %v737
    %v753 = vadd.f32 %v752, %v738
    %v754 = vadd.f32 %v753, %v739
    %v755 = vadd.f32 %v754, %v740
    %v756 = vadd.f32 %v755, %v741
    %v757 = vadd.f32 %v613, %v756
    %758 = vst [vmem:[#allocation5] sm:$0xff] %v757
    %759 = vst.msk [vmem:[#allocation3] sm:$0xff] %vm456, %v488
    // Predicated region
    $region58: #{tpu_custom_call.1} parent=1 // pred_check
      %p760 = pneg %p77
    $region59: #{tpu_custom_call.1} parent=1 // pred_check_branch
      %762 = sbr.rel (%p760) target = $region61
    $region60: #{tpu_custom_call.1} parent=1 // pred_region
      %v763 = vld [vmem:[#allocation5] sm:$0xff]
      %v764 = vld [vmem:[#allocation4] sm:$0xff]
      %766 = vset.pattern.permute.xlu0 0
      %767 = vperm.xlu0 %766, %v764
      %v768 = vpop.permute.xlu0 %767
      %v770 = vrcp.pop %v768
      %v771 = vmul.f32 %v763, %v770
      %v772 = vld [vmem:[%s7] sm:$0xff]
      %v773 = vld [vmem:[%s7 + $0x8] sm:$0xff]
      %v774 = vld [vmem:[%s7 + $0x10] sm:$0xff]
      %v775 = vld [vmem:[%s7 + $0x18] sm:$0xff]
      %v776 = vld [vmem:[%s7 + $0x20] sm:$0xff]
      %v777 = vld [vmem:[%s7 + $0x28] sm:$0xff]
      %v778 = vld [vmem:[%s7 + $0x30] sm:$0xff]
      %v779 = vld [vmem:[%s7 + $0x38] sm:$0xff]
      %v780 = vld [vmem:[%s7 + $0x40] sm:$0xff]
      %v781 = vld [vmem:[%s7 + $0x48] sm:$0xff]
      %v782 = vld [vmem:[%s7 + $0x50] sm:$0xff]
      %v783 = vld [vmem:[%s7 + $0x58] sm:$0xff]
      %v784 = vld [vmem:[%s7 + $0x60] sm:$0xff]
      %v785 = vld [vmem:[%s7 + $0x68] sm:$0xff]
      %v786 = vld [vmem:[%s7 + $0x70] sm:$0xff]
      %v787 = vld [vmem:[%s7 + $0x78] sm:$0xff]
      %v788 = vld [vmem:[%s0] sm:$0xff]
      %v789 = vld [vmem:[#allocation11] sm:$0xff]
      %v790 = vld [vmem:[#allocation11 + $0x8] sm:$0xff]
      %v791 = vld [vmem:[#allocation11 + $0x10] sm:$0xff]
      %v792 = vld [vmem:[#allocation11 + $0x18] sm:$0xff]
      %v793 = vld [vmem:[#allocation11 + $0x20] sm:$0xff]
      %v794 = vld [vmem:[#allocation11 + $0x28] sm:$0xff]
      %v795 = vld [vmem:[#allocation11 + $0x30] sm:$0xff]
      %v796 = vld [vmem:[#allocation11 + $0x38] sm:$0xff]
      %v797 = vld [vmem:[#allocation11 + $0x40] sm:$0xff]
      %v798 = vld [vmem:[#allocation11 + $0x48] sm:$0xff]
      %v799 = vld [vmem:[#allocation11 + $0x50] sm:$0xff]
      %v800 = vld [vmem:[#allocation11 + $0x58] sm:$0xff]
      %v801 = vld [vmem:[#allocation11 + $0x60] sm:$0xff]
      %v802 = vld [vmem:[#allocation11 + $0x68] sm:$0xff]
      %v803 = vld [vmem:[#allocation11 + $0x70] sm:$0xff]
      %v804 = vld [vmem:[#allocation11 + $0x78] sm:$0xff]
      %805 = vmatprep.subr.mxu0 0.0
      %806 = vmatpush1.msra.mxu0 %v804
      %807 = vmatprep.subr.mxu0 0.0
      %808 = vmatpush1.msra.mxu0 %v803
      %809 = vmatprep.subr.mxu0 0.0
      %810 = vmatpush1.msra.mxu0 %v802
      %811 = vmatprep.subr.mxu0 0.0
      %812 = vmatpush1.msra.mxu0 %v801
      %813 = vmatprep.subr.mxu0 0.0
      %814 = vmatpush1.msra.mxu0 %v800
      %815 = vmatprep.subr.mxu0 0.0
      %816 = vmatpush1.msra.mxu0 %v799
      %817 = vmatprep.subr.mxu0 0.0
      %818 = vmatpush1.msra.mxu0 %v798
      %819 = vmatprep.subr.mxu0 0.0
      %820 = vmatpush1.msra.mxu0 %v797
      %821 = vmatprep.subr.mxu0 0.0
      %822 = vmatpush1.msra.mxu0 %v796
      %823 = vmatprep.subr.mxu0 0.0
      %824 = vmatpush1.msra.mxu0 %v795
      %825 = vmatprep.subr.mxu0 0.0
      %826 = vmatpush1.msra.mxu0 %v794
      %827 = vmatprep.subr.mxu0 0.0
      %828 = vmatpush1.msra.mxu0 %v793
      %829 = vmatprep.subr.mxu0 0.0
      %830 = vmatpush1.msra.mxu0 %v792
      %831 = vmatprep.subr.mxu0 0.0
      %832 = vmatpush1.msra.mxu0 %v791
      %833 = vmatprep.subr.mxu0 0.0
      %834 = vmatpush1.msra.mxu0 %v790
      %835 = vmatprep.subr.mxu0 0.0
      %836 = vmatpush1.msra.mxu0 %v789
      %837 = vmatprep.subr.mxu0 0.0
      %838 = vmatpush2.msra.mxu0 0.0
      %839 = vmatprep.subr.mxu0 0.0
      %840 = vmatpush2.msra.mxu0 0.0
      %841 = vmatprep.subr.mxu0 0.0
      %842 = vmatpush2.msra.mxu0 0.0
      %843 = vmatprep.subr.mxu0 0.0
      %844 = vmatpush2.msra.mxu0 0.0
      %845 = vmatprep.subr.mxu0 0.0
      %846 = vmatpush2.msra.mxu0 0.0
      %847 = vmatprep.subr.mxu0 0.0
      %848 = vmatpush2.msra.mxu0 0.0
      %849 = vmatprep.subr.mxu0 0.0
      %850 = vmatpush2.msra.mxu0 0.0
      %851 = vmatprep.subr.mxu0 0.0
      %852 = vmatpush2.msra.mxu0 0.0
      %853 = vmatprep.subr.mxu0 0.0
      %854 = vmatpush2.msra.mxu0 0.0
      %855 = vmatprep.subr.mxu0 0.0
      %856 = vmatpush2.msra.mxu0 0.0
      %857 = vmatprep.subr.mxu0 0.0
      %858 = vmatpush2.msra.mxu0 0.0
      %859 = vmatprep.subr.mxu0 0.0
      %860 = vmatpush2.msra.mxu0 0.0
      %861 = vmatprep.subr.mxu0 0.0
      %862 = vmatpush2.msra.mxu0 0.0
      %863 = vmatprep.subr.mxu0 0.0
      %864 = vmatpush2.msra.mxu0 0.0
      %865 = vmatprep.subr.mxu0 0.0
      %866 = vmatpush2.msra.mxu0 0.0
      %867 = vmatprep.subr.mxu0 0.0
      %868 = vmatpush2.msra.mxu0 0.0
      %869 = vmatprep.mubr.f32.mxu0 0.0
      %870 = vmatmul.mubr.f32.gmra.mxu0 %v788
      %v871 = vpop.f32.mrf.mxu0
      %v872 = vadd.f32 0.0, %v871
      %v873 = vpop.f32.mrf.mxu0
      %874 = vdwg.mxu0
      %875 = vmatprep.subr.mxu0 0.0
      %876 = vmatpush1.msra.mxu0 %v787
      %877 = vmatprep.subr.mxu0 0.0
      %878 = vmatpush1.msra.mxu0 %v786
      %879 = vmatprep.subr.mxu0 0.0
      %880 = vmatpush1.msra.mxu0 %v785
      %881 = vmatprep.subr.mxu0 0.0
      %882 = vmatpush1.msra.mxu0 %v784
      %883 = vmatprep.subr.mxu0 0.0
      %884 = vmatpush1.msra.mxu0 %v783
      %885 = vmatprep.subr.mxu0 0.0
      %886 = vmatpush1.msra.mxu0 %v782
      %887 = vmatprep.subr.mxu0 0.0
      %888 = vmatpush1.msra.mxu0 %v781
      %889 = vmatprep.subr.mxu0 0.0
      %890 = vmatpush1.msra.mxu0 %v780
      %891 = vmatprep.subr.mxu0 0.0
      %892 = vmatpush1.msra.mxu0 %v779
      %893 = vmatprep.subr.mxu0 0.0
      %894 = vmatpush1.msra.mxu0 %v778
      %895 = vmatprep.subr.mxu0 0.0
      %896 = vmatpush1.msra.mxu0 %v777
      %897 = vmatprep.subr.mxu0 0.0
      %898 = vmatpush1.msra.mxu0 %v776
      %899 = vmatprep.subr.mxu0 0.0
      %900 = vmatpush1.msra.mxu0 %v775
      %901 = vmatprep.subr.mxu0 0.0
      %902 = vmatpush1.msra.mxu0 %v774
      %903 = vmatprep.subr.mxu0 0.0
      %904 = vmatpush1.msra.mxu0 %v773
      %905 = vmatprep.subr.mxu0 0.0
      %906 = vmatpush1.msra.mxu0 %v772
      %907 = vmatprep.subr.mxu0 0.0
      %908 = vmatpush2.msra.mxu0 0.0
      %909 = vmatprep.subr.mxu0 0.0
      %910 = vmatpush2.msra.mxu0 0.0
      %911 = vmatprep.subr.mxu0 0.0
      %912 = vmatpush2.msra.mxu0 0.0
      %913 = vmatprep.subr.mxu0 0.0
      %914 = vmatpush2.msra.mxu0 0.0
      %915 = vmatprep.subr.mxu0 0.0
      %916 = vmatpush2.msra.mxu0 0.0
      %917 = vmatprep.subr.mxu0 0.0
      %918 = vmatpush2.msra.mxu0 0.0
      %919 = vmatprep.subr.mxu0 0.0
      %920 = vmatpush2.msra.mxu0 0.0
      %921 = vmatprep.subr.mxu0 0.0
      %922 = vmatpush2.msra.mxu0 0.0
      %923 = vmatprep.subr.mxu0 0.0
      %924 = vmatpush2.msra.mxu0 0.0
      %925 = vmatprep.subr.mxu0 0.0
      %926 = vmatpush2.msra.mxu0 0.0
      %927 = vmatprep.subr.mxu0 0.0
      %928 = vmatpush2.msra.mxu0 0.0
      %929 = vmatprep.subr.mxu0 0.0
      %930 = vmatpush2.msra.mxu0 0.0
      %931 = vmatprep.subr.mxu0 0.0
      %932 = vmatpush2.msra.mxu0 0.0
      %933 = vmatprep.subr.mxu0 0.0
      %934 = vmatpush2.msra.mxu0 0.0
      %935 = vmatprep.subr.mxu0 0.0
      %936 = vmatpush2.msra.mxu0 0.0
      %937 = vmatprep.subr.mxu0 0.0
      %938 = vmatpush2.msra.mxu0 0.0
      %939 = vmatprep.mubr.f32.mxu0 0.0
      %940 = vmatmul.mubr.f32.gmra.mxu0 %v771
      %v941 = vpop.f32.mrf.mxu0
      %v942 = vadd.f32 %v872, %v941
      %v943 = vpop.f32.mrf.mxu0
      %944 = vdwg.mxu0
      %v945 = vld [vmem:[%s9] sm:$0x1]
      %v947 = vlaneseq
      %v948 = vshrl.u32 %v947, 7
      %v949 = vsub.s32 0, %v948
      %v950 = vrot.slane %v945, %v949
      %v952 = vadd.f32 %v942, %v950
      %v953 = vtanh.pop %v952
      %954 = vst [vmem:[#allocation12] sm:$0xff] %v953
    $region61: #{tpu_custom_call.1} parent=1 // pred_fallthru
      _
    // Predicated region
    $region62: #{tpu_custom_call.1} parent=1 // pred_check
      _
    $region63: #{tpu_custom_call.1} parent=1 // pred_check_branch
      %956 = sbr.rel (0) target = $region65
    $region64: #{tpu_custom_call.1} parent=1 // pred_region
      %s958 = ssub.s32 128, 128
      %959 = vsyncadd [#allocation8], %s958
      %s961 = sshll.u32 [#allocation12], 4
      %s962 = int_to_ptr.vmem [resolvable:$true] %s961
      %964 = dma.vmem_to_hbm [thread:$0]  %s962, 128, %s10, [#allocation8]
    $region65: #{tpu_custom_call.1} parent=1 // pred_fallthru
      _
    // Predicated region
    $region66: #{tpu_custom_call.1} parent=1 // pred_check
      _
    $region67: #{tpu_custom_call.1} parent=1 // pred_check_branch
      %966 = sbr.rel (0) target = $region69
    $region68: #{tpu_custom_call.1} parent=1 // pred_region
      %967 = dma.done [#allocation8], 128
    $region69: #{tpu_custom_call.1} parent=1 // pred_fallthru
      _
    %968 = vsyncpa [#allocation7], 1
    %969 = vsyncpa [#allocation10], 1
    %970 = vsyncpa [#allocation8], 1

</llo_original>
